<compile_context>
chip_gen: v7x
topology: tpu7x:2x2x1
jax: 0.10.0
libtpu: 0.0.40
codegen_flags: <defaults>
</compile_context>

<pallas_src>
import functools
import math

import jax
import jax.numpy as jnp
from jax.experimental import pallas as pl
from jax.experimental.pallas import tpu as pltpu


# --------------------------------------------------------------------------
# pltpu.roll direction probe (runs one trivial kernel at import time so the
# gather-shift convention is robust across JAX versions).
# --------------------------------------------------------------------------


def _roll_probe_kernel(x_ref, o_ref):
    o_ref[...] = pltpu.roll(x_ref[...], 1, axis=1)


def _probe_roll_gather_sign():
    """Return s so that pltpu.roll(v, (s*off) % N, axis=1)[:, p] == v[:, (p+off) % N]."""
    x = jnp.tile(jnp.arange(128, dtype=jnp.float32)[None, :], (8, 1))
    y = pl.pallas_call(
        _roll_probe_kernel,
        out_shape=jax.ShapeDtypeStruct((8, 128), jnp.float32),
    )(x)
    # jnp.roll convention: element from lane 127 lands in lane 0.
    return -1 if int(y[0, 0]) == 127 else 1


_ROLL_GATHER_SIGN = _probe_roll_gather_sign()


# ------------------------------ Pallas kernel ------------------------------


def _fused_flow_unet_kernel(x_ref, cond_ref, add1_ref, w1_ref, w2_ref, b2_ref,
                            out_ref, xcat_ref, pat1_ref,
                            *, B, C, H, W, HIDDEN, OUT, OUT_PAD, roll_sign):
    """Fused surrogate UNet, channels-on-sublanes / pixels-on-lanes.

    x_ref:    (B, C, H*W)            ODE state (NCHW rows), f32
    cond_ref: (Bc, C, H*W)           condition (Bc == B or 1), f32
    add1_ref: (B, HIDDEN, 1)         conv_in bias + time embedding, f32
    w1_ref:   (HIDDEN, 9*2C)         conv_in weights (tap-major), f32
    w2_ref:   (9*OUT_PAD, HIDDEN)    conv_out weights (tap-major, OUT padded), f32
    b2_ref:   (OUT, 1)               conv_out bias, f32
    out_ref:  (B, OUT, H*W)          vector field, NCHW rows, f32
    scratch:  xcat (2C, B*H*W) f32,  pat1 (9*2C, B*H*W) f32
    """
    CIN = 2 * C
    HW = H * W
    NPIX = B * HW
    cond_b = cond_ref.shape[0]

    taps = [(ky - 1, kx - 1) for ky in range(3) for kx in range(3)]

    def gather(v, off):
        # result[:, p] = v[:, (p + off) % NPIX]; cyclic wrap is always masked out.
        if off == 0:
            return v
        return pltpu.roll(v, (roll_sign * off) % NPIX, axis=1)

    def pad_masks(rows):
        # Zero-padding masks for each tap, as a function of the OUTPUT pixel.
        pix = jax.lax.broadcasted_iota(jnp.int32, (rows, NPIX), 1)
        col = pix % W
        row = (pix // W) % H          # within-image row (batch is stacked on lanes)
        masks = []
        for dy, dx in taps:
            parts = []
            if dy == -1:
                parts.append(row >= 1)
            if dy == 1:
                parts.append(row <= H - 2)
            if dx == -1:
                parts.append(col >= 1)
            if dx == 1:
                parts.append(col <= W - 2)
            if not parts:
                masks.append(None)    # centre tap: no padding involved
            else:
                m = parts[0]
                for p in parts[1:]:
                    m = jnp.logical_and(m, p)
                masks.append(m)
        return masks

    # ---- stage concat([x, condition], channel axis) in VMEM ----------------
    # Channels on sublanes (2C = 8 = one sublane tile), pixels on lanes.  The
    # batch-1 condition broadcast is a static re-read, never materialized in HBM.
    for b in range(B):
        cols = slice(b * HW, (b + 1) * HW)            # 256-aligned lane slice
        xcat_ref[0:C, cols] = x_ref[b]
        xcat_ref[C:CIN, cols] = cond_ref[b if cond_b == B else 0]
    inp = xcat_ref[...]                               # (CIN, NPIX) f32

    # ---- conv_in as ONE im2col matmul: (HIDDEN, 9*CIN) x (9*CIN, NPIX) -----
    # Each pat1 write is a full 8-sublane x NPIX-lane block (lane dense,
    # sublane aligned); every row is overwritten, so no zero-fill is needed.
    masks_in = pad_masks(CIN)
    for t, (dy, dx) in enumerate(taps):
        v = gather(inp, dy * W + dx)
        if masks_in[t] is not None:
            v = jnp.where(masks_in[t], v, 0.0)
        pat1_ref[t * CIN:(t + 1) * CIN, :] = v
    h = jnp.dot(w1_ref[...], pat1_ref[...],
                preferred_element_type=jnp.float32)   # (HIDDEN, NPIX) f32

    # ---- + (conv_in bias + time embedding), then SiLU ----------------------
    addmap = jnp.concatenate(
        [jnp.broadcast_to(add1_ref[b], (HIDDEN, HW)) for b in range(B)],
        axis=1)                                       # (HIDDEN, NPIX), aligned concat
    h = h + addmap
    h = h / (1.0 + jnp.exp(-h))                       # SiLU (exp on EUP)

    # ---- conv_out in scatter form ------------------------------------------
    # One (9*OUT_PAD, HIDDEN) x (HIDDEN, NPIX) matmul of per-tap partials,
    # then 9 rolled+masked accumulations on (OUT_PAD, NPIX) slabs.  This
    # replaces the 9*HIDDEN-row im2col staging buffer and the padded hidden
    # buffer of the previous version (~4x less staged data).
    partial = jnp.dot(w2_ref[...], h,
                      preferred_element_type=jnp.float32)   # (9*OUT_PAD, NPIX)
    masks_out = pad_masks(OUT_PAD)
    acc = partial[4 * OUT_PAD:5 * OUT_PAD, :]         # centre tap (dy = dx = 0)
    for t, (dy, dx) in enumerate(taps):
        if dy == 0 and dx == 0:
            continue
        v = gather(partial[t * OUT_PAD:(t + 1) * OUT_PAD, :], dy * W + dx)
        acc = acc + jnp.where(masks_out[t], v, 0.0)

    # ---- bias + store, directly in NCHW row order (256-lane dense stores) --
    for b in range(B):
        out_ref[b] = acc[0:OUT, b * HW:(b + 1) * HW] + b2_ref[...]


# ------------------------------ Pallas wrapper ------------------------------


def fused_flow_unet(x_nchw, cond_nchw, add1, w1t, w2s, b2c):
    """Runs the fused conv_in(+temb, SiLU) -> conv_out model.

    x_nchw: (B, C, H, W) f32; cond_nchw: (Bc, C, H, W) f32 (Bc == B or 1)
    add1:   (B, HIDDEN) f32 (conv_in bias + time embedding)
    w1t:    (HIDDEN, 9*2C) f32; w2s: (9*OUT_PAD, HIDDEN) f32; b2c: (OUT, 1) f32
    Returns (B, OUT, H, W) f32 (NCHW).
    """
    B, C, H, W = x_nchw.shape
    HW = H * W
    NPIX = B * HW
    CIN = 2 * C
    HIDDEN = w1t.shape[0]
    OUT_PAD = w2s.shape[0] // 9
    OUT = b2c.shape[0]

    # Free contiguous reshapes: NCHW rows already have channels on the
    # sublane axis and flattened pixels on the lane axis -> no transposes.
    x3 = x_nchw.reshape(B, C, HW)
    cond3 = cond_nchw.reshape(cond_nchw.shape[0], C, HW)
    add1_3 = add1[:, :, None]                         # (B, HIDDEN, 1)

    kernel = functools.partial(
        _fused_flow_unet_kernel,
        B=B, C=C, H=H, W=W, HIDDEN=HIDDEN, OUT=OUT, OUT_PAD=OUT_PAD,
        roll_sign=_ROLL_GATHER_SIGN)

    flops = 2 * NPIX * (9 * CIN * HIDDEN + HIDDEN * 9 * OUT_PAD)
    bytes_accessed = 4 * (x3.size + cond3.size + add1_3.size + w1t.size
                          + w2s.size + b2c.size + B * OUT * HW)

    # NOTE: at production H*W this single invocation should become a grid over
    # pixel-row tiles (with a 1-row halo), marked pltpu.CORE_PARALLEL on v7x so
    # both TensorCores split the rows, with the tile sized per generation
    # (64 MiB VMEM on v7x vs 128 MiB on v5e/v6e, vmem_limit_bytes set
    # explicitly).  At 2x4x16x16 everything fits in a few hundred KiB of VMEM,
    # so one un-gridded call (M = B*H*W = 512 per matmul, no per-step pipeline
    # overhead) is fastest on every generation.
    out = pl.pallas_call(
        kernel,
        out_shape=jax.ShapeDtypeStruct((B, OUT, HW), jnp.float32),
        in_specs=[pl.BlockSpec(memory_space=pltpu.MemorySpace.VMEM)] * 6,
        out_specs=pl.BlockSpec(memory_space=pltpu.MemorySpace.VMEM),
        scratch_shapes=[
            pltpu.VMEM((CIN, NPIX), jnp.float32),       # concat([x, cond]) stage
            pltpu.VMEM((9 * CIN, NPIX), jnp.float32),   # conv_in im2col patches
        ],
        cost_estimate=pl.CostEstimate(
            flops=flops,
            transcendentals=HIDDEN * NPIX,
            bytes_accessed=bytes_accessed),
    )(x3, cond3, add1_3, w1t, w2s, b2c)

    return out.reshape(B, OUT, H, W)                  # free reshape back to NCHW


# ------------------------- surrogate UNet + params -------------------------


def sinusoidal_embedding(t, dim):
    """t: (B,) -> (B, dim) sinusoidal time embedding (tiny XLA glue)."""
    half = dim // 2
    freqs = jnp.exp(
        -math.log(10000.0) * jnp.arange(half, dtype=jnp.float32) / half)
    args = t[:, None].astype(jnp.float32) * freqs[None, :]
    return jnp.concatenate([jnp.cos(args), jnp.sin(args)], axis=-1)


def init_params(key, *, in_ch, hidden, out_ch, temb_dim):
    ks = jax.random.split(key, 4)

    def lin(k, fan_in, shape):
        return jax.random.normal(k, shape, jnp.float32) / math.sqrt(fan_in)

    return {
        "t_w1": lin(ks[0], temb_dim, (temb_dim, hidden)),
        "t_b1": jnp.zeros((hidden,), jnp.float32),
        "t_w2": lin(ks[1], hidden, (hidden, hidden)),
        "t_b2": jnp.zeros((hidden,), jnp.float32),
        "conv_in_w": lin(ks[2], in_ch * 9, (3, 3, in_ch, hidden)),    # HWIO
        "conv_in_b": jnp.zeros((hidden,), jnp.float32),
        "conv_out_w": lin(ks[3], hidden * 9, (3, 3, hidden, out_ch)),  # HWIO
        "conv_out_b": jnp.zeros((out_ch,), jnp.float32),
    }


def _conv_in_bias_plus_temb(params, t_input):
    """(conv_in bias + time-embedding MLP output) as one (B, HIDDEN) add vector."""
    temb_dim = params["t_w1"].shape[0]
    emb = sinusoidal_embedding(t_input, temb_dim)
    th = emb @ params["t_w1"] + params["t_b1"]
    th = th / (1.0 + jnp.exp(-th))                    # SiLU
    temb = th @ params["t_w2"] + params["t_b2"]       # (B, HIDDEN)
    return params["conv_in_b"][None, :] + temb


# ----------------------------- FlowDynamics --------------------------------


def flow_dynamics_forward(params, condition_nchw, t, x_nchw):
    """Mirrors FlowDynamics.forward(t, x). Inputs/outputs are NCHW."""
    batch_size = x_nchw.shape[0]
    t_input = jnp.full((batch_size,), jnp.asarray(t, jnp.float32))   # t.expand(B)

    current_condition = condition_nchw
    cond_b = condition_nchw.shape[0]
    if cond_b != batch_size:
        if cond_b == 1 and batch_size > 1:
            pass   # broadcast handled by static indexing inside the kernel
        elif cond_b > 1 and batch_size == 1:
            print(f"Warning: ODE batch size {batch_size} differs from condition "
                  f"batch size {cond_b}. Using first condition for single ODE item.")
            current_condition = condition_nchw[0:1]
        else:
            raise RuntimeError(
                f"ODE batch size {batch_size} and condition batch size "
                f"{cond_b} are incompatible.")

    hidden = params["conv_in_w"].shape[-1]
    in_ch = params["conv_in_w"].shape[-2]             # = 2*C
    out_ch = params["conv_out_w"].shape[-1]
    out_pad = max(8, ((out_ch + 7) // 8) * 8)         # sublane-aligned OUT padding

    add1 = _conv_in_bias_plus_temb(params, t_input)   # (B, HIDDEN)

    # Tap-major weight layouts for the kernel (tiny arrays; layout plumbing only).
    # conv_in:  (HIDDEN, 9*in_ch), row block tap t pairs with channels [x, cond].
    w1t = params["conv_in_w"].transpose(3, 0, 1, 2).reshape(hidden, 9 * in_ch)
    # conv_out (scatter form): (9*OUT_PAD, HIDDEN), OUT zero-padded to 8 rows/tap.
    w2p = jnp.zeros((3, 3, hidden, out_pad), jnp.float32)
    w2p = w2p.at[..., :out_ch].set(params["conv_out_w"])
    w2s = w2p.transpose(0, 1, 3, 2).reshape(9 * out_pad, hidden)
    b2c = params["conv_out_b"].reshape(out_ch, 1)

    return fused_flow_unet(x_nchw, current_condition, add1, w1t, w2s, b2c)


# --------------------------- pure-JAX reference -----------------------------


def flow_dynamics_reference(params, condition, t, x):
    """Plain-XLA reference of the same forward pass (for validation)."""
    B = x.shape[0]
    t_input = jnp.full((B,), jnp.asarray(t, jnp.float32))
    cond = condition
    if condition.shape[0] != B:
        if condition.shape[0] == 1 and B > 1:
            cond = jnp.broadcast_to(condition, (B,) + condition.shape[1:])
        elif condition.shape[0] > 1 and B == 1:
            cond = condition[0:1]
    inp = jnp.concatenate([x, cond], axis=1)          # torch.cat([x, condition], 1)

    add1 = _conv_in_bias_plus_temb(params, t_input)   # (B, HIDDEN)
    h = jax.lax.conv_general_dilated(
        inp, params["conv_in_w"], (1, 1), "SAME",
        dimension_numbers=("NCHW", "HWIO", "NCHW"),
        precision=jax.lax.Precision.HIGHEST)
    h = h + add1[:, :, None, None]
    h = h / (1.0 + jnp.exp(-h))
    out = jax.lax.conv_general_dilated(
        h, params["conv_out_w"], (1, 1), "SAME",
        dimension_numbers=("NCHW", "HWIO", "NCHW"),
        precision=jax.lax.Precision.HIGHEST)
    return out + params["conv_out_b"][None, :, None, None]


# ----------------------------------- main -----------------------------------

if __name__ == "__main__":
    B, C, H, W = 2, 4, 16, 16
    HIDDEN = 32
    TEMB_DIM = 32

    key = jax.random.PRNGKey(0)
    k_x, k_cond, k_param = jax.random.split(key, 3)

    x = jax.random.normal(k_x, (B, C, H, W), jnp.float32)             # ODE state
    condition = jax.random.normal(k_cond, (1, C, H, W), jnp.float32)  # blurred obs
    t = jnp.float32(0.5)

    params = init_params(k_param, in_ch=2 * C, hidden=HIDDEN,
                         out_ch=C, temb_dim=TEMB_DIM)

    fwd = jax.jit(functools.partial(flow_dynamics_forward, params, condition))
    vector_field = jax.block_until_ready(fwd(t, x))

    assert vector_field.shape == (B, C, H, W), vector_field.shape
    assert vector_field.dtype == jnp.float32
    assert bool(jnp.all(jnp.isfinite(vector_field)))

    reference = flow_dynamics_reference(params, condition, t, x)
    max_err = float(jnp.max(jnp.abs(vector_field - reference)))
    assert max_err < 5e-2, f"kernel/reference mismatch: max abs err = {max_err}"

    print("KERNEL_OK")
</pallas_src>

<mosaic_0001>
module attributes {stable_mosaic.version = 11 : i64} {
  func.func @_roll_probe_kernel(%arg0: memref<8x128xf32, #tpu.memory_space<vmem>>, %arg1: memref<8x128xf32, #tpu.memory_space<vmem>>) attributes {dimension_semantics = [], scalar_prefetch = 0 : i64, scratch_operands = 0 : i64, tpu.core_type = #tpu.core_type<tc>} {
    %c0 = arith.constant 0 : index
    %c0_0 = arith.constant 0 : index
    %0 = vector.load %arg0[%c0, %c0_0] : memref<8x128xf32, #tpu.memory_space<vmem>>, vector<8x128xf32>
    %c1_i32 = arith.constant 1 : i32
    %1 = tpu.dynamic_rotate %0 by %c1_i32 dim 1 : vector<8x128xf32>, i32 -> vector<8x128xf32>
    %c0_1 = arith.constant 0 : index
    %c0_2 = arith.constant 0 : index
    %2 = vector.load %arg1[%c0_1, %c0_2] : memref<8x128xf32, #tpu.memory_space<vmem>>, vector<8x128xf32>
    tpu.vector_store %arg1[%c0_1, %c0_2], %1 {strides = array<i32>} : memref<8x128xf32, #tpu.memory_space<vmem>>, vector<8x128xf32>,
    return
  }
}

</mosaic_0001>

<llo_original>
// kernel: tpu_custom_call.1
$region0: #{tpu_custom_call.1}
  #allocation0 [shape = 'u32[]', space=smem, size = 0x4, offset = 0x4, fixed_abs, tag = 'smem constant byte address 0x4 - core index']
  #allocation1 [shape = 'u32[144,128]{1,0:T(1,128)}', space=vmem, size = 0x12000, scoped, tag = 'internal scratch']
  %s0 = inlined_call_operand.hbm [shape: f32[8,128], index: 0, kind: input, shape index: {}]
  %s1 = inlined_call_operand.hbm [shape: f32[8,128], index: 1, kind: output, shape index: {}]
  %s2 = sld [smem:[#allocation0]]
  $region18: #{tpu_custom_call.1} parent=0
    _
  %s4 = ssub.s32 1, %s2
  %s5 = scalar_select 0, %s4, %s2
  $region1: #{tpu_custom_call.1} parent=0
    #allocation2 [shape = 'u8[4096]{0}', space=vmem, size = 0x1000, scoped, tag = 'input window, operand 0, single buffered']
    #allocation3 [shape = 's32[1]{0}', space=sflag, size = 0x4, scoped, tag = 'scoped memory for tpu_custom_call.1']
    #allocation4 [shape = 's32[1]{0}', space=sflag, size = 0x4, scoped, tag = 'scoped memory for tpu_custom_call.1']
    #allocation5 [shape = 'u8[4096]{0}', space=vmem, size = 0x1000, scoped, tag = 'output window, operand 0, single buffered']
    %6 = vsyncpa [#allocation3], 0
    %7 = vsyncpa [#allocation4], 0
    // Predicated region
    $region2: #{tpu_custom_call.1} parent=1 // pred_check
      _
    $region3: #{tpu_custom_call.1} parent=1 // pred_check_branch
      %9 = sbr.rel (0) target = $region5
    $region4: #{tpu_custom_call.1} parent=1 // pred_region
      %s11 = ssub.s32 128, 128
      %12 = vsyncadd [#allocation3], %s11
      %s14 = sshll.u32 [#allocation2], 4
      %s15 = int_to_ptr.vmem [resolvable:$true] %s14
      %17 = dma.hbm_to_vmem [thread:$0]  %s0, 128, %s15, [#allocation3]
    $region5: #{tpu_custom_call.1} parent=1 // pred_fallthru
      _
    // Predicated region
    $region6: #{tpu_custom_call.1} parent=1 // pred_check
      _
    $region7: #{tpu_custom_call.1} parent=1 // pred_check_branch
      %19 = sbr.rel (0) target = $region9
    $region8: #{tpu_custom_call.1} parent=1 // pred_region
      %20 = dma.done [#allocation3], 128
    $region9: #{tpu_custom_call.1} parent=1 // pred_fallthru
      _
    %v21 = vld [vmem:[#allocation2] sm:$0xff]
    %22 = vrot.lane.b32.xlu0 %v21, 1
    %v23 = vpop.permute.xlu0 %22
    %24 = vst [vmem:[#allocation5] sm:$0xff] %v23
    // Predicated region
    $region10: #{tpu_custom_call.1} parent=1 // pred_check
      _
    $region11: #{tpu_custom_call.1} parent=1 // pred_check_branch
      %26 = sbr.rel (0) target = $region13
    $region12: #{tpu_custom_call.1} parent=1 // pred_region
      %s28 = ssub.s32 128, 128
      %29 = vsyncadd [#allocation4], %s28
      %s31 = sshll.u32 [#allocation5], 4
      %s32 = int_to_ptr.vmem [resolvable:$true] %s31
      %34 = dma.vmem_to_hbm [thread:$0]  %s32, 128, %s1, [#allocation4]
    $region13: #{tpu_custom_call.1} parent=1 // pred_fallthru
      _
    // Predicated region
    $region14: #{tpu_custom_call.1} parent=1 // pred_check
      _
    $region15: #{tpu_custom_call.1} parent=1 // pred_check_branch
      %36 = sbr.rel (0) target = $region17
    $region16: #{tpu_custom_call.1} parent=1 // pred_region
      %37 = dma.done [#allocation4], 128
    $region17: #{tpu_custom_call.1} parent=1 // pred_fallthru
      _
    %38 = vsyncpa [#allocation3], 1
    %39 = vsyncpa [#allocation4], 1

</llo_original>
